<compile_context>
chip_gen: v6e
topology: v6e:2x2x1
jax: 0.10.0
libtpu: 0.0.40
codegen_flags: <defaults>
</compile_context>

<pallas_src>
import functools

import jax
import jax.numpy as jnp
from jax.experimental import pallas as pl
from jax.experimental.pallas import tpu as pltpu


def _dice_partial_kernel(x_ref, t_ref, inter_ref, card_ref, *, tail):
    """Per-tile partial dice sums.

    x_ref:     (N, C, TILE_P) logits (any float dtype; upcast in-kernel)
    t_ref:     (N, TILE_P)    integer class labels
    inter_ref: (1, N, C)      f32 partial sum of prob * onehot over this tile
    card_ref:  (1, N, C)      f32 partial sum of (prob + onehot) over this tile
    tail:      static int; number of valid pixels in the LAST tile (0 => all tiles full)
    """

    def tile_sums(x, t, valid):
        # Numerically-stable softmax over the class (sublane) axis; normalization
        # factored through a single per-pixel reciprocal (EUP) + a VPU multiply.
        m = jnp.max(x, axis=1, keepdims=True)                 # (N, 1, T)
        e = jnp.exp(x - m)                                    # (N, C, T)
        s = jnp.sum(e, axis=1, keepdims=True)                 # (N, 1, T)
        prob = e * pl.reciprocal(s, approx=False)             # (N, C, T)

        # One-hot via compare+select; never materialize a float one-hot or prob+onehot.
        cls = jax.lax.broadcasted_iota(jnp.int32, x.shape, 1)  # (N, C, T)
        eq = cls == t[:, None, :]                              # (N, C, T) bool

        if valid is not None:
            # Last (partial) tile only: drop contributions from out-of-range lanes.
            # where(valid, ., 0) also squashes any NaN/Inf coming from the
            # uninitialized tail of the partial block.
            eq = jnp.logical_and(eq, valid)
            prob = jnp.where(valid, prob, 0.0)

        inter = jnp.sum(jnp.where(eq, prob, 0.0), axis=2)                      # (N, C)
        card = jnp.sum(prob, axis=2) + jnp.sum(eq.astype(jnp.float32), axis=2)  # (N, C)
        return inter, card

    x = x_ref[...].astype(jnp.float32)   # (N, C, T)
    t = t_ref[...].astype(jnp.int32)     # (N, T)

    # Hot path: no masking work at all.
    inter, card = tile_sums(x, t, None)
    inter_ref[0] = inter
    card_ref[0] = card

    if tail:
        # Only the final tile is partial; only it pays for the mask (iota, compare,
        # selects). All other grid steps skip this branch at runtime.
        @pl.when(pl.program_id(0) == pl.num_programs(0) - 1)
        def _():
            pix = jax.lax.broadcasted_iota(jnp.int32, x.shape, 2)
            valid = pix < tail
            inter_m, card_m = tile_sums(x, t, valid)
            inter_ref[0] = inter_m
            card_ref[0] = card_m


def _choose_tile(n_pixels, n, c, logit_itemsize, label_itemsize,
                 vmem_budget_bytes=32 * 1024 * 1024, max_tile=65536):
    """Pick a lane-dense pixel tile.

    Budget counts the double-buffered input blocks AND ~8 full sublane-padded
    (N, C_pad8, tile) f32 in-kernel temporaries, keeping total VMEM comfortably
    under the 48 MiB limit (and under v7x's 64 MiB physical VMEM per core).
    """
    if n_pixels <= 128:
        # Single full-extent block (legal even when not a multiple of 128).
        return n_pixels
    c_pad8 = -(-c // 8) * 8
    bytes_per_pixel = (2 * (n * c * logit_itemsize + n * label_itemsize)  # dbl-buffered inputs
                       + 8 * n * c_pad8 * 4)                              # f32 compute temps
    tile = (vmem_budget_bytes // bytes_per_pixel) // 128 * 128
    tile = max(128, min(tile, max_tile))
    # Keep >= ~4 grid steps when possible so the single "parallel" pixel axis
    # actually shards across both TensorCores on v7x.
    quarter = -(-(-(-n_pixels // 4)) // 128) * 128  # round_up(cdiv(P,4), 128)
    tile = min(tile, max(128, quarter))
    return tile


@functools.partial(jax.jit, static_argnames=("smooth", "eps"))
def dice_loss(logits_nchw, labels_nhw, smooth=1.0, eps=1e-08):
    """Mirrors DiceLoss.forward(logits, labels)."""
    N, C, H, W = logits_nchw.shape
    P = H * W

    # Native layout: pixels on the lane axis, classes on sublanes. No transpose, no pad.
    x = logits_nchw.reshape(N, C, P)
    t = labels_nhw.reshape(N, P)
    # Stream labels in their native dtype when it is an 8- or 32-bit int
    # (int8/uint8 callers save HBM bandwidth); otherwise fall back to int32.
    if not (jnp.issubdtype(t.dtype, jnp.integer) and t.dtype.itemsize in (1, 4)):
        t = t.astype(jnp.int32)

    tile = _choose_tile(P, N, C, x.dtype.itemsize, t.dtype.itemsize)
    n_tiles = pl.cdiv(P, tile)
    tail = P % tile  # static; >0 means the last tile is partial and gets masked

    kernel = functools.partial(_dice_partial_kernel, tail=tail)

    inter_part, card_part = pl.pallas_call(
        kernel,
        out_shape=(
            jax.ShapeDtypeStruct((n_tiles, N, C), jnp.float32),
            jax.ShapeDtypeStruct((n_tiles, N, C), jnp.float32),
        ),
        grid_spec=pltpu.PrefetchScalarGridSpec(
            num_scalar_prefetch=0,
            grid=(n_tiles,),
            in_specs=[
                pl.BlockSpec((N, C, tile), lambda j: (0, 0, j)),
                pl.BlockSpec((N, tile), lambda j: (0, j)),
            ],
            out_specs=[
                pl.BlockSpec((1, N, C), lambda j: (j, 0, 0)),
                pl.BlockSpec((1, N, C), lambda j: (j, 0, 0)),
            ],
        ),
        compiler_params=pltpu.CompilerParams(
            dimension_semantics=("parallel",),
            vmem_limit_bytes=48 * 1024 * 1024),
    )(x, t)

    # Tiny cross-tile reduction + final dice arithmetic in plain JAX.
    inter = jnp.sum(inter_part, axis=0)             # (N, C)
    card = jnp.sum(card_part, axis=0)               # (N, C)
    dice = 1.0 - (2.0 * inter + smooth) / (card + smooth + eps)
    per_class = jnp.mean(dice, axis=0)              # mean over batch, per class
    return jnp.sum(per_class) / C                   # sum over classes / num_class


def _reference_dice(logits_nchw, labels_nhw, smooth=1.0, eps=1e-08):
    """Pure-JAX mirror of the PyTorch module for sanity checking."""
    N, C, H, W = logits_nchw.shape
    probs = jax.nn.softmax(logits_nchw.astype(jnp.float32), axis=1)
    onehot = jnp.transpose(jax.nn.one_hot(labels_nhw, C, dtype=jnp.float32),
                           (0, 3, 1, 2))
    p = probs.reshape(N, C, -1)
    y = onehot.reshape(N, C, -1)
    inter = jnp.sum(p * y, axis=2)
    card = jnp.sum(p + y, axis=2)
    dice = 1.0 - (2.0 * inter + smooth) / (card + smooth + eps)
    per_class = jnp.mean(dice, axis=0)
    return jnp.sum(per_class) / C


if __name__ == "__main__":
    key = jax.random.PRNGKey(0)
    k1, k2, k3, k4 = jax.random.split(key, 4)

    # Primary shape: batch=2, classes=4, 16x16 spatial (P multiple of 128).
    N, C, H, W = 2, 4, 16, 16
    logits = jax.random.normal(k1, (N, C, H, W), dtype=jnp.float32)
    labels = jax.random.randint(k2, (N, H, W), 0, C, dtype=jnp.int32)

    loss = dice_loss(logits, labels)
    jax.block_until_ready(loss)
    ref = _reference_dice(logits, labels)
    assert jnp.allclose(loss, ref, atol=1e-5, rtol=1e-5), (loss, ref)

    # Ragged spatial size (P=225, not a multiple of 128): exercises the
    # partial-block + pl.when-gated last-tile mask path (no jnp.pad anywhere).
    H2, W2 = 15, 15
    logits2 = jax.random.normal(k3, (N, C, H2, W2), dtype=jnp.float32)
    labels2 = jax.random.randint(k4, (N, H2, W2), 0, C, dtype=jnp.int32)
    loss2 = dice_loss(logits2, labels2)
    jax.block_until_ready(loss2)
    ref2 = _reference_dice(logits2, labels2)
    assert jnp.allclose(loss2, ref2, atol=1e-5, rtol=1e-5), (loss2, ref2)

    print("KERNEL_OK")
</pallas_src>

<mosaic_0001>
module attributes {stable_mosaic.version = 11 : i64} {
  func.func @_dice_partial_kernel(%arg0: i32, %arg1: memref<2x4x128xf32, #tpu.memory_space<vmem>>, %arg2: memref<2x128xi32, #tpu.memory_space<vmem>>, %arg3: memref<1x2x4xf32, #tpu.memory_space<vmem>>, %arg4: memref<1x2x4xf32, #tpu.memory_space<vmem>>) attributes {dimension_semantics = [#tpu.dimension_semantics<parallel>], iteration_bounds = array<i64: 2>, scalar_prefetch = 0 : i64, scratch_operands = 0 : i64, tpu.core_type = #tpu.core_type<tc>, window_params = [{transform_indices = @transform_0, window_bounds = array<i64: 2, 4, 128>}, {transform_indices = @transform_1, window_bounds = array<i64: 2, 128>}, {transform_indices = @transform_2, window_bounds = array<i64: 1, 2, 4>}, {transform_indices = @transform_3, window_bounds = array<i64: 1, 2, 4>}]} {
    %c0 = arith.constant 0 : index
    %c0_0 = arith.constant 0 : index
    %c0_1 = arith.constant 0 : index
    %0 = vector.load %arg1[%c0, %c0_0, %c0_1] : memref<2x4x128xf32, #tpu.memory_space<vmem>>, vector<2x4x128xf32>
    %c0_2 = arith.constant 0 : index
    %c0_3 = arith.constant 0 : index
    %1 = vector.load %arg2[%c0_2, %c0_3] : memref<2x128xi32, #tpu.memory_space<vmem>>, vector<2x128xi32>
    %cst = arith.constant dense<0xFF800000> : vector<2x128xf32>
    %2 = vector.multi_reduction <maximumf>, %0, %cst [1] : vector<2x4x128xf32> to vector<2x128xf32>
    %3 = vector.shape_cast %2 : vector<2x128xf32> to vector<2x1x128xf32>
    %4 = vector.broadcast %3 : vector<2x1x128xf32> to vector<2x4x128xf32>
    %5 = arith.subf %0, %4 : vector<2x4x128xf32>
    %6 = math.exp %5 : vector<2x4x128xf32>
    %cst_4 = arith.constant dense<0.000000e+00> : vector<2x128xf32>
    %7 = vector.multi_reduction <add>, %6, %cst_4 [1] : vector<2x4x128xf32> to vector<2x128xf32>
    %8 = vector.shape_cast %7 : vector<2x128xf32> to vector<2x1x128xf32>
    %9 = tpu.reciprocal %8 : vector<2x1x128xf32> -> vector<2x1x128xf32>
    %10 = vector.broadcast %9 : vector<2x1x128xf32> to vector<2x4x128xf32>
    %11 = arith.mulf %6, %10 : vector<2x4x128xf32>
    %12 = tpu.iota {dimensions = array<i32: 1>} : vector<2x4x128xi32>
    %13 = vector.shape_cast %1 : vector<2x128xi32> to vector<2x1x128xi32>
    %14 = vector.broadcast %13 : vector<2x1x128xi32> to vector<2x4x128xi32>
    %15 = arith.cmpi eq, %12, %14 : vector<2x4x128xi32>
    %cst_5 = arith.constant 0.000000e+00 : f32
    %16 = vector.broadcast %cst_5 : f32 to vector<2x4x128xf32>
    %17 = arith.select %15, %11, %16 : vector<2x4x128xi1>, vector<2x4x128xf32>
    %cst_6 = arith.constant dense<0.000000e+00> : vector<2x4xf32>
    %18 = vector.multi_reduction <add>, %17, %cst_6 [2] : vector<2x4x128xf32> to vector<2x4xf32>
    %cst_7 = arith.constant dense<0.000000e+00> : vector<2x4xf32>
    %19 = vector.multi_reduction <add>, %11, %cst_7 [2] : vector<2x4x128xf32> to vector<2x4xf32>
    %20 = arith.extui %15 : vector<2x4x128xi1> to vector<2x4x128xi32>
    %21 = arith.sitofp %20 : vector<2x4x128xi32> to vector<2x4x128xf32>
    %cst_8 = arith.constant dense<0.000000e+00> : vector<2x4xf32>
    %22 = vector.multi_reduction <add>, %21, %cst_8 [2] : vector<2x4x128xf32> to vector<2x4xf32>
    %23 = arith.addf %19, %22 : vector<2x4xf32>
    %c0_9 = arith.constant 0 : index
    %c0_10 = arith.constant 0 : index
    %c0_11 = arith.constant 0 : index
    %24 = vector.load %arg3[%c0_9, %c0_10, %c0_11] : memref<1x2x4xf32, #tpu.memory_space<vmem>>, vector<1x2x4xf32>
    %25 = vector.shape_cast %24 : vector<1x2x4xf32> to vector<2x4xf32>
    %26 = vector.shape_cast %18 : vector<2x4xf32> to vector<1x2x4xf32>
    tpu.vector_store %arg3[%c0_9, %c0_10, %c0_11], %26 {strides = array<i32>} : memref<1x2x4xf32, #tpu.memory_space<vmem>>, vector<1x2x4xf32>,
    %c0_12 = arith.constant 0 : index
    %c0_13 = arith.constant 0 : index
    %c0_14 = arith.constant 0 : index
    %27 = vector.load %arg4[%c0_12, %c0_13, %c0_14] : memref<1x2x4xf32, #tpu.memory_space<vmem>>, vector<1x2x4xf32>
    %28 = vector.shape_cast %27 : vector<1x2x4xf32> to vector<2x4xf32>
    %29 = vector.shape_cast %23 : vector<2x4xf32> to vector<1x2x4xf32>
    tpu.vector_store %arg4[%c0_12, %c0_13, %c0_14], %29 {strides = array<i32>} : memref<1x2x4xf32, #tpu.memory_space<vmem>>, vector<1x2x4xf32>,
    return
  }
  func.func @transform_0(%arg0: i32) -> (i32, i32, i32) {
    %c0_i32 = arith.constant 0 : i32
    %c0_i32_0 = arith.constant 0 : i32
    %c0_i32_1 = arith.constant 0 : i32
    return %c0_i32, %c0_i32_0, %arg0 : i32, i32, i32
  }
  func.func @transform_1(%arg0: i32) -> (i32, i32) {
    %c0_i32 = arith.constant 0 : i32
    %c0_i32_0 = arith.constant 0 : i32
    return %c0_i32, %arg0 : i32, i32
  }
  func.func @transform_2(%arg0: i32) -> (i32, i32, i32) {
    %c0_i32 = arith.constant 0 : i32
    %c0_i32_0 = arith.constant 0 : i32
    %c0_i32_1 = arith.constant 0 : i32
    return %arg0, %c0_i32, %c0_i32_0 : i32, i32, i32
  }
  func.func @transform_3(%arg0: i32) -> (i32, i32, i32) {
    %c0_i32 = arith.constant 0 : i32
    %c0_i32_0 = arith.constant 0 : i32
    %c0_i32_1 = arith.constant 0 : i32
    return %arg0, %c0_i32, %c0_i32_0 : i32, i32, i32
  }
}

</mosaic_0001>

<llo_original>
// kernel: dice_loss.1
$region0: #{dice_loss.1}
  #allocation0 [shape = 'u32[]', space=smem, size = 0x4, offset = 0x4, fixed_abs, tag = 'smem constant byte address 0x4 - core index']
  #allocation1 [shape = 'u32[144,128]{1,0:T(1,128)}', space=vmem, size = 0x12000, scoped, tag = 'internal scratch']
  %s0 = inlined_call_operand.vmem [shape: f32[2,4,256], index: 0, kind: input, shape index: {}]
  %s1 = inlined_call_operand.vmem [shape: s32[2,256], index: 1, kind: input, shape index: {}]
  %s2 = inlined_call_operand.vmem [shape: f32[2,2,4], index: 2, kind: output, shape index: {0}]
  %s3 = inlined_call_operand.vmem [shape: f32[2,2,4], index: 3, kind: output, shape index: {1}]
  %4 = xla_tuple %s2, %s3
  %s5 = sld [smem:[#allocation0]]
  $region90: #{dice_loss.1} parent=0
    _
  %s7 = ssub.s32 1, %s5
  %s8 = scalar_select 0, %s7, %s5
  $region1: #{dice_loss.1} parent=0
    #allocation2 [shape = 'u8[8192]{0}', space=vmem, size = 0x2000, scoped, tag = 'input window, operand 0']
    loop: start=0, step=1, limit=4
    $region2: #{dice_loss.1} parent=1 // loop_pre_header
      _
    $region3: #{dice_loss.1} parent=1 // loop_header
      %s10 = sphi 0, %s14
      %p11 = scmp.ge.s32.totalorder %s10, 4
      %s20 = sphi 0, %s22
      %s23 = sphi 0, %s20
      %s24 = sphi 0, %s23
      %s40 = sphi 0, %s24
      %s46 = sphi 0, %s48
      %s49 = sphi 0, %s46
      %s50 = sphi 0, %s49
      %s66 = sphi 0, %s50
      %s72 = sphi 0, %s74
      %s75 = sphi 0, %s72
      %s76 = sphi 0, %s75
      %s92 = sphi 0, %s76
      %s98 = sphi 0, %s100
      %s101 = sphi 0, %s98
      %s102 = sphi 0, %s101
      %s118 = sphi 0, %s102
    $region4: #{dice_loss.1} parent=1 // loop_header_branch
      %13 = sbr.rel (%p11) target = $region8
    $region5: #{dice_loss.1} parent=1 // loop_body
      %s15 = ssub.s32 %s10, 1
      %s16 = ssub.s32 %s10, 2
      %s17 = sadd.s32 %s10, 1
      %s18 = ssub.s32 %s10, %s17
      %p19 = scmp.eq.s32.totalorder %s18, 0
      %s21 = sadd.s32 %s20, 1
      %s22 = scalar_select %p19, %s20, %s21
      %p25 = pneg %p19
      %p26 = scmp.eq.s32.totalorder %s10, 1
      %p27 = por %p25, %p26
      %p28 = scmp.ne.s32.totalorder %s20, %s23
      %p29 = scmp.eq.s32.totalorder %s10, 0
      %p30 = por %p28, %p29
      %p31 = scmp.ne.s32.totalorder %s20, %s23
      %p32 = scmp.eq.s32.totalorder %s15, 1
      %p33 = por %p31, %p32
      %p34 = scmp.ne.s32.totalorder %s23, %s24
      %p35 = scmp.eq.s32.totalorder %s15, 0
      %p36 = por %p34, %p35
      %p37 = scmp.ne.s32.totalorder %s23, %s24
      %p38 = scmp.eq.s32.totalorder %s16, 1
      %p39 = por %p37, %p38
      %p41 = scmp.ne.s32.totalorder %s24, %s40
      %p42 = scmp.eq.s32.totalorder %s16, 0
      %p43 = por %p41, %p42
      %s44 = ssub.s32 %s10, %s17
      %p45 = scmp.eq.s32.totalorder %s44, 0
      %s47 = sadd.s32 %s46, 1
      %s48 = scalar_select %p45, %s46, %s47
      %p51 = pneg %p45
      %p52 = scmp.eq.s32.totalorder %s10, 1
      %p53 = por %p51, %p52
      %p54 = scmp.ne.s32.totalorder %s46, %s49
      %p55 = scmp.eq.s32.totalorder %s10, 0
      %p56 = por %p54, %p55
      %p57 = scmp.ne.s32.totalorder %s46, %s49
      %p58 = scmp.eq.s32.totalorder %s15, 1
      %p59 = por %p57, %p58
      %p60 = scmp.ne.s32.totalorder %s49, %s50
      %p61 = scmp.eq.s32.totalorder %s15, 0
      %p62 = por %p60, %p61
      %p63 = scmp.ne.s32.totalorder %s49, %s50
      %p64 = scmp.eq.s32.totalorder %s16, 1
      %p65 = por %p63, %p64
      %p67 = scmp.ne.s32.totalorder %s50, %s66
      %p68 = scmp.eq.s32.totalorder %s16, 0
      %p69 = por %p67, %p68
      %s70 = ssub.s32 %s10, %s17
      %p71 = scmp.eq.s32.totalorder %s70, 0
      %s73 = sadd.s32 %s72, 1
      %s74 = scalar_select %p71, %s72, %s73
      %p77 = pneg %p71
      %p78 = scmp.eq.s32.totalorder %s10, 1
      %p79 = por %p77, %p78
      %p80 = scmp.ne.s32.totalorder %s72, %s75
      %p81 = scmp.eq.s32.totalorder %s10, 0
      %p82 = por %p80, %p81
      %p83 = scmp.ne.s32.totalorder %s72, %s75
      %p84 = scmp.eq.s32.totalorder %s15, 1
      %p85 = por %p83, %p84
      %p86 = scmp.ne.s32.totalorder %s75, %s76
      %p87 = scmp.eq.s32.totalorder %s15, 0
      %p88 = por %p86, %p87
      %p89 = scmp.ne.s32.totalorder %s75, %s76
      %p90 = scmp.eq.s32.totalorder %s16, 1
      %p91 = por %p89, %p90
      %p93 = scmp.ne.s32.totalorder %s76, %s92
      %p94 = scmp.eq.s32.totalorder %s16, 0
      %p95 = por %p93, %p94
      %s96 = ssub.s32 %s10, %s17
      %p97 = scmp.eq.s32.totalorder %s96, 0
      %s99 = sadd.s32 %s98, 1
      %s100 = scalar_select %p97, %s98, %s99
      %p103 = pneg %p97
      %p104 = scmp.eq.s32.totalorder %s10, 1
      %p105 = por %p103, %p104
      %p106 = scmp.ne.s32.totalorder %s98, %s101
      %p107 = scmp.eq.s32.totalorder %s10, 0
      %p108 = por %p106, %p107
      %p109 = scmp.ne.s32.totalorder %s98, %s101
      %p110 = scmp.eq.s32.totalorder %s15, 1
      %p111 = por %p109, %p110
      %p112 = scmp.ne.s32.totalorder %s101, %s102
      %p113 = scmp.eq.s32.totalorder %s15, 0
      %p114 = por %p112, %p113
      %p115 = scmp.ne.s32.totalorder %s101, %s102
      %p116 = scmp.eq.s32.totalorder %s16, 1
      %p117 = por %p115, %p116
      %p119 = scmp.ne.s32.totalorder %s102, %s118
      %p120 = scmp.eq.s32.totalorder %s16, 0
      %p121 = por %p119, %p120
      %p122 = scmp.le.s32.totalorder 1, %s10
      %p123 = scmp.lt.s32.totalorder %s10, 3
      %p124 = pnand %p122, %p123
      %p125 = pneg %p124
      // Predicated region
      $region9: #{dice_loss.1} parent=5 // pred_check
        _
      $region10: #{dice_loss.1} parent=5 // pred_check_branch
        %127 = sbr.rel (%p124) target = $region12
      $region11: #{dice_loss.1} parent=5 // pred_region
        %s128 = ssub.s32 %s10, 1
      $region12: #{dice_loss.1} parent=5 // pred_fallthru
        _
      %p129 = scmp.lt.s32.totalorder %s10, 2
      // Predicated region
      $region13: #{dice_loss.1} parent=5 // pred_check
        %p130 = pneg %p129
      $region14: #{dice_loss.1} parent=5 // pred_check_branch
        %132 = sbr.rel (%p130) target = $region16
      $region15: #{dice_loss.1} parent=5 // pred_region
        // Predicated region
        $region17: #{dice_loss.1} parent=15 // pred_check
          %p133 = pneg %p30
        $region18: #{dice_loss.1} parent=15 // pred_check_branch
          %135 = sbr.rel (%p133) target = $region20
        $region19: #{dice_loss.1} parent=15 // pred_region
          %s136 = sand.u32 %s20, 1
          %s137 = sand.u32 %s20, 1
          %s138 = smul.addr %s137, 8
          %s139 = scalar_lea.vmem [#allocation2], %s138
          %s140 = smul.addr %s10, 4
          %s141 = scalar_lea.vmem %s0, %s140
          // Predicated region
          $region21: #{dice_loss.1} parent=19 // pred_check
            _
          $region22: #{dice_loss.1} parent=19 // pred_check_branch
            %143 = sbr.rel (0) target = $region24
          $region23: #{dice_loss.1} parent=19 // pred_region
            // Predicated region
            $region25: #{dice_loss.1} parent=23 // pred_check
              _
            $region26: #{dice_loss.1} parent=23 // pred_check_branch
              %145 = sbr.rel target = $region28
            $region27: #{dice_loss.1} parent=23 // pred_region
              // Predicated region
              $region40: #{dice_loss.1} parent=27 // pred_check
                _
              $region41: #{dice_loss.1} parent=27 // pred_check_branch
                %163 = sbr.rel (0) target = $region43
              $region42: #{dice_loss.1} parent=27 // pred_region
                loop: start=0, step=1, limit=1
                $region44: #{dice_loss.1} parent=42 // loop_pre_header
                  _
                $region45: #{dice_loss.1} parent=42 // loop_header
                  %s165 = sphi 0, %s169
                  %p166 = scmp.ge.s32.totalorder %s165, 1
                  %s170 = sphi %s141, %s141
                  %s171 = sphi %s139, %s139
                $region46: #{dice_loss.1} parent=42 // loop_header_branch
                  %168 = sbr.rel (%p166) target = $region50
                $region47: #{dice_loss.1} parent=42 // loop_body
                  _
                $region48: #{dice_loss.1} parent=42 // loop_footer
                  %s169 = sadd.s32 1, %s165
                $region49: #{dice_loss.1} parent=42 // loop_footer_branch
                  %164 = sbr.rel target = $region45
                $region50: #{dice_loss.1} parent=42 // loop_exit
                  _
                %s173 = ssub.s32 16, 1
                loop: start=0, step=1, limit=1
                $region51: #{dice_loss.1} parent=42 // loop_pre_header
                  _
                $region52: #{dice_loss.1} parent=42 // loop_header
                  %s175 = sphi 0, %s179
                  %p176 = scmp.ge.s32.totalorder %s175, 1
                  %s180 = sphi %s141, %s141
                  %s181 = sphi %s139, %s139
                $region53: #{dice_loss.1} parent=42 // loop_header_branch
                  %178 = sbr.rel (%p176) target = $region57
                $region54: #{dice_loss.1} parent=42 // loop_body
                  %v182 = vld [vmem:[%s180] sm:%s173]
                  %183 = vst [vmem:[%s181] sm:%s173] %v182
                  %v184 = vld [vmem:[%s180 + $0x8] sm:%s173]
                  %185 = vst [vmem:[%s181 + $0x4] sm:%s173] %v184
                $region55: #{dice_loss.1} parent=42 // loop_footer
                  %s179 = sadd.s32 1, %s175
                $region56: #{dice_loss.1} parent=42 // loop_footer_branch
                  %174 = sbr.rel target = $region52
                $region57: #{dice_loss.1} parent=42 // loop_exit
                  _
              $region43: #{dice_loss.1} parent=27 // pred_fallthru
                _
            $region28: #{dice_loss.1} parent=23 // pred_fallthru
              _
            // Predicated region
            $region29: #{dice_loss.1} parent=23 // pred_check
              _
            $region30: #{dice_loss.1} parent=23 // pred_check_branch
              %147 = sbr.rel (0) target = $region32
            $region31: #{dice_loss.1} parent=23 // pred_region
              %s149 = ssub.s32 16, 1
              loop: start=0, step=1, limit=1
              $region33: #{dice_loss.1} parent=31 // loop_pre_header
                _
              $region34: #{dice_loss.1} parent=31 // loop_header
                %s151 = sphi 0, %s155
                %p152 = scmp.ge.s32.totalorder %s151, 1
                %s156 = sphi %s141, %s141
                %s157 = sphi %s139, %s139
              $region35: #{dice_loss.1} parent=31 // loop_header_branch
                %154 = sbr.rel (%p152) target = $region39
              $region36: #{dice_loss.1} parent=31 // loop_body
                %v158 = vld [vmem:[%s156] sm:%s149]
                %159 = vst [vmem:[%s157] sm:%s149] %v158
                %v160 = vld [vmem:[%s156 + $0x8] sm:%s149]
                %161 = vst [vmem:[%s157 + $0x4] sm:%s149] %v160
              $region37: #{dice_loss.1} parent=31 // loop_footer
                %s155 = sadd.s32 1, %s151
              $region38: #{dice_loss.1} parent=31 // loop_footer_branch
                %150 = sbr.rel target = $region34
              $region39: #{dice_loss.1} parent=31 // loop_exit
                _
            $region32: #{dice_loss.1} parent=23 // pred_fallthru
              _
          $region24: #{dice_loss.1} parent=19 // pred_fallthru
            _
          %186 = vnop
        $region20: #{dice_loss.1} parent=15 // pred_fallthru
          _
        // Predicated region
        $region58: #{dice_loss.1} parent=15 // pred_check
          %p187 = pneg %p56
        $region59: #{dice_loss.1} parent=15 // pred_check_branch
          %189 = sbr.rel (%p187) target = $region61
        $region60: #{dice_loss.1} parent=15 // pred_region
          %p190 = scmp.lt.s32.totalorder %s10, 1
          %s191 = scalar_select %p190, %s10, 1
          %s192 = smul.addr %s191, 2
          %s193 = scalar_lea.vmem %s1, %s192
        $region61: #{dice_loss.1} parent=15 // pred_fallthru
          _
      $region16: #{dice_loss.1} parent=5 // pred_fallthru
        _
      %p194 = scmp.le.s32.totalorder 1, %s10
      %p195 = scmp.lt.s32.totalorder %s10, 3
      %p196 = pnand %p194, %p195
      %p197 = pneg %p196
      // Predicated region
      $region62: #{dice_loss.1} parent=5 // pred_check
        _
      $region63: #{dice_loss.1} parent=5 // pred_check_branch
        %199 = sbr.rel (%p196) target = $region65
      $region64: #{dice_loss.1} parent=5 // pred_region
        %s200 = ssub.s32 %s10, 1
        %s201 = sand.u32 %s23, 1
        %s202 = sand.u32 %s23, 1
        %s203 = smul.addr %s202, 8
        %s204 = scalar_lea.vmem [#allocation2], %s203
        // Predicated region
        $region66: #{dice_loss.1} parent=64 // pred_check
          %p205 = pneg %p36
        $region67: #{dice_loss.1} parent=64 // pred_check_branch
          %207 = sbr.rel (%p205) target = $region69
        $region68: #{dice_loss.1} parent=64 // pred_region
          _
        $region69: #{dice_loss.1} parent=64 // pred_fallthru
          _
        %s208 = sand.u32 %s23, 1
        %s209 = sand.u32 %s23, 1
        %s210 = smul.addr %s209, 8
        %s211 = scalar_lea.vmem [#allocation2], %s210
        %p212 = pneg %p36
        %p213 = pneg %p33
        %p214 = scmp.lt.s32.totalorder %s15, 1
        %s215 = scalar_select %p214, %s15, 1
        %s216 = smul.addr %s215, 2
        %s217 = scalar_lea.vmem %s1, %s216
        %p218 = pneg %p62
        %p219 = pneg %p59
        %p220 = pneg %p88
        %p221 = pneg %p85
        %p222 = scmp.lt.s32.totalorder %s15, 1
        %s223 = scalar_select %p222, %s15, 1
        %s224 = smul.addr %s223, 2
        %s225 = scalar_lea.vmem %s2, %s224
        %p226 = pneg %p114
        %p227 = pneg %p111
        %p228 = scmp.lt.s32.totalorder %s15, 1
        %s229 = scalar_select %p228, %s15, 1
        %s230 = smul.addr %s229, 2
        %s231 = scalar_lea.vmem %s3, %s230
        %p232 = scmp.lt.s32.totalorder %s15, 1
        %s233 = scalar_select %p232, %s15, 1
        %s234 = smul.addr %s233, 2
        %s235 = scalar_lea.vmem %s1, %s234
        %p236 = scmp.lt.s32.totalorder %s15, 1
        %s237 = scalar_select %p236, %s15, 1
        %s238 = smul.addr %s237, 2
        %s239 = scalar_lea.vmem %s2, %s238
        %p240 = scmp.lt.s32.totalorder %s15, 1
        %s241 = scalar_select %p240, %s15, 1
        %s242 = smul.addr %s241, 2
        %s243 = scalar_lea.vmem %s3, %s242
        %v244 = vld [vmem:[%s204] sm:$0xf]
        %v245 = vld [vmem:[%s204 + $0x4] sm:$0xf]
        %v246 = vld [vmem:[%s235] sm:$0x3]
        %vm247 = vcmask 1043456
        %v248 = vsel %vm247, %v244, -inf
        %v249 = vrot.slane %v248, 4
        %v250 = vmax.f32 %v248, %v249
        %v251 = vrot.slane %v250, 2
        %v252 = vmax.f32 %v250, %v251
        %v253 = vrot.slane %v252, 1
        %v254 = vmax.f32 %v252, %v253
        %v255 = vsel %vm247, %v245, -inf
        %v256 = vrot.slane %v255, 4
        %v257 = vmax.f32 %v255, %v256
        %v258 = vrot.slane %v257, 2
        %v259 = vmax.f32 %v257, %v258
        %v260 = vrot.slane %v259, 1
        %v261 = vmax.f32 %v259, %v260
        %v262 = vsub.f32 %v244, %v254
        %v263 = vsub.f32 %v245, %v261
        %v264 = vmul.f32 %v262, 1.442695
        %v265 = vpow.pop %v264
        %v266 = vmul.f32 %v263, 1.442695
        %v267 = vpow.pop %v266
        %v268 = vsel %vm247, %v265, 0.0
        %v269 = vrot.slane %v268, 4
        %v270 = vadd.f32 %v268, %v269
        %v271 = vrot.slane %v270, 2
        %v272 = vadd.f32 %v270, %v271
        %v273 = vrot.slane %v272, 1
        %v274 = vadd.f32 %v272, %v273
        %v275 = vsel %vm247, %v267, 0.0
        %v276 = vrot.slane %v275, 4
        %v277 = vadd.f32 %v275, %v276
        %v278 = vrot.slane %v277, 2
        %v279 = vadd.f32 %v277, %v278
        %v280 = vrot.slane %v279, 1
        %v281 = vadd.f32 %v279, %v280
        %v282 = vrcp.pop %v274
        %v283 = vrcp.pop %v281
        %v284 = vmul.f32 %v265, %v282
        %v285 = vmul.f32 %v267, %v283
        %v286 = vlaneseq
        %v287 = vshrl.u32 %v286, 7
        %v289 = vunpack.c.l.s4 1966171168
        %v290 = vunpack.c.0.s8 %v289
        %v291 = vlaneseq
        %v292 = vshrl.u32 %v291, 7
        %v293 = vsub.s32 %v290, %v292
        %v294 = vrot.slane %v246, %v293
        %v295 = vcombine.high %v294, %v294
        %v297 = vunpack.c.l.s4 1966171168
        %v298 = vunpack.c.0.s8 %v297
        %v299 = vlaneseq
        %v300 = vshrl.u32 %v299, 7
        %v301 = vsub.s32 %v298, %v300
        %v302 = vrot.slane %v294, %v301
        %v304 = vunpack.c.l.s4 1966171168
        %v305 = vunpack.c.0.s8 %v304
        %v306 = vlaneseq
        %v307 = vshrl.u32 %v306, 7
        %v308 = vsub.s32 %v305, %v307
        %v309 = vrot.slane %v295, %v308
        %v310 = vlaneseq
        %v311 = vshrl.u32 %v310, 7
        %v312 = vsub.s32 0, %v311
        %v313 = vrot.slane %v302, %v312
        %v314 = vlaneseq
        %v315 = vshrl.u32 %v314, 7
        %v316 = vsub.s32 0, %v315
        %v317 = vrot.slane %v309, %v316
        %vm318 = vcmp.eq.s32.totalorder %v287, %v313
        %vm319 = vcmp.eq.s32.totalorder %v287, %v317
        %v320 = vsel %vm318, %v284, 0.0
        %v321 = vsel %vm319, %v285, 0.0
        %v322 = vsel %vm247, %v320, 0.0
        %323 = vadd.xlane.f32.xlu0 %v322
        %v324 = vpop.xlane.xlu0 %323
        %v325 = vsel %vm247, %v321, 0.0
        %326 = vadd.xlane.f32.xlu0 %v325
        %v327 = vpop.xlane.xlu0 %326
        %v328 = vsel %vm247, %v284, 0.0
        %329 = vadd.xlane.f32.xlu0 %v328
        %v330 = vpop.xlane.xlu0 %329
        %v331 = vsel %vm247, %v285, 0.0
        %332 = vadd.xlane.f32.xlu0 %v331
        %v333 = vpop.xlane.xlu0 %332
        %v334 = vsel %vm318, 1, 0
        %v335 = vsel %vm319, 1, 0
        %v336 = vcvt.s32.f32 %v334
        %v337 = vcvt.s32.f32 %v335
        %v338 = vsel %vm247, %v336, 0.0
        %339 = vadd.xlane.f32.xlu0 %v338
        %v340 = vpop.xlane.xlu0 %339
        %v341 = vsel %vm247, %v337, 0.0
        %342 = vadd.xlane.f32.xlu0 %v341
        %v343 = vpop.xlane.xlu0 %342
        %v344 = vadd.f32 %v330, %v340
        %v345 = vadd.f32 %v333, %v343
        %v348 = vlaneseq
        %v349 = vand.u32 %v348, 127
        %v350 = vlaneseq
        %v351 = vshrl.u32 %v350, 7
        %v352 = vsub.s32 %v349, %v351
        %v353 = vrot.slane %v324, %v352
        %v354 = vlaneseq
        %v355 = vshrl.u32 %v354, 7
        %v356 = vsub.s32 %v349, %v355
        %v357 = vrot.slane %v327, %v356
        %vm358 = vcmask 1041409
        %v359 = vsel %vm358, %v357, %v353
        %vm361 = vcmask 25600
        %362 = vst.msk [vmem:[%s239] sm:$0x3] %vm361, %v359
        %v365 = vlaneseq
        %v366 = vshrl.u32 %v365, 7
        %v367 = vsub.s32 %v349, %v366
        %v368 = vrot.slane %v344, %v367
        %v369 = vlaneseq
        %v370 = vshrl.u32 %v369, 7
        %v371 = vsub.s32 %v349, %v370
        %v372 = vrot.slane %v345, %v371
        %v373 = vsel %vm358, %v372, %v368
        %375 = vst.msk [vmem:[%s243] sm:$0x3] %vm361, %v373
        %p376 = scmp.lt.s32.totalorder %s15, 1
        %s377 = scalar_select %p376, %s15, 1
        %s378 = smul.addr %s377, 2
        %s379 = scalar_lea.vmem %s2, %s378
        %p380 = scmp.lt.s32.totalorder %s15, 1
        %s381 = scalar_select %p380, %s15, 1
        %s382 = smul.addr %s381, 2
        %s383 = scalar_lea.vmem %s3, %s382
        // Predicated region
        $region70: #{dice_loss.1} parent=64 // pred_check
          %p384 = pneg %p85
        $region71: #{dice_loss.1} parent=64 // pred_check_branch
          %386 = sbr.rel (%p384) target = $region73
        $region72: #{dice_loss.1} parent=64 // pred_region
          _
        $region73: #{dice_loss.1} parent=64 // pred_fallthru
          _
        // Predicated region
        $region74: #{dice_loss.1} parent=64 // pred_check
          %p387 = pneg %p111
        $region75: #{dice_loss.1} parent=64 // pred_check_branch
          %389 = sbr.rel (%p387) target = $region77
        $region76: #{dice_loss.1} parent=64 // pred_region
          _
        $region77: #{dice_loss.1} parent=64 // pred_fallthru
          _
      $region65: #{dice_loss.1} parent=5 // pred_fallthru
        _
      %p390 = scmp.le.s32.totalorder 2, %s10
      // Predicated region
      $region78: #{dice_loss.1} parent=5 // pred_check
        %p391 = pneg %p390
      $region79: #{dice_loss.1} parent=5 // pred_check_branch
        %393 = sbr.rel (%p391) target = $region81
      $region80: #{dice_loss.1} parent=5 // pred_region
        %s394 = ssub.s32 %s10, 2
        // Predicated region
        $region82: #{dice_loss.1} parent=80 // pred_check
          %p395 = pneg %p91
        $region83: #{dice_loss.1} parent=80 // pred_check_branch
          %397 = sbr.rel (%p395) target = $region85
        $region84: #{dice_loss.1} parent=80 // pred_region
          %p398 = scmp.lt.s32.totalorder %s16, 1
          %s399 = scalar_select %p398, %s16, 1
          %s400 = smul.addr %s399, 2
          %s401 = scalar_lea.vmem %s2, %s400
        $region85: #{dice_loss.1} parent=80 // pred_fallthru
          _
        // Predicated region
        $region86: #{dice_loss.1} parent=80 // pred_check
          %p402 = pneg %p117
        $region87: #{dice_loss.1} parent=80 // pred_check_branch
          %404 = sbr.rel (%p402) target = $region89
        $region88: #{dice_loss.1} parent=80 // pred_region
          %p405 = scmp.lt.s32.totalorder %s16, 1
          %s406 = scalar_select %p405, %s16, 1
          %s407 = smul.addr %s406, 2
          %s408 = scalar_lea.vmem %s3, %s407
        $region89: #{dice_loss.1} parent=80 // pred_fallthru
          _
      $region81: #{dice_loss.1} parent=5 // pred_fallthru
        _
    $region6: #{dice_loss.1} parent=1 // loop_footer
      %s14 = sadd.s32 1, %s10
    $region7: #{dice_loss.1} parent=1 // loop_footer_branch
      %9 = sbr.rel target = $region3
    $region8: #{dice_loss.1} parent=1 // loop_exit
      _

</llo_original>
